<compile_context>
chip_gen: v5e
topology: v5e:2x2
jax: 0.10.0
libtpu: 0.0.40
codegen_flags: <defaults>
</compile_context>

<pallas_src>
import jax
import jax.numpy as jnp
from jax.experimental import pallas as pl
from jax.experimental.pallas import tpu as pltpu

NEGATIVE_SLOPE = 3                      # integer: in_features = 1 + 3 = 4
IN_FEATURES = 1 + NEGATIVE_SLOPE        # 4
OUT_FEATURES = 8

PACK = 32                               # original rows folded into one packed row
IN_PACKED = PACK * IN_FEATURES          # 128  (exactly one lane-full vreg row)
OUT_PACKED = PACK * OUT_FEATURES        # 256  (multiple of 128 -> unmasked stores)
TARGET_BLOCK_ROWS = 2048                # packed rows per grid step (= 64Ki x rows)


def linear_leaky_kernel(x_ref, w_ref, b_ref, o_ref):
    """One batch tile (lane-dense packed layout).

    x_ref: (block_rows, 128)   32 original rows packed per packed row
    w_ref: (128, 256)          block-diagonal kron(I_32, W^T), resident in VMEM
    b_ref: (1, 256)            bias tiled 32x
    o_ref: (block_rows, 256)
    """
    y = jnp.dot(x_ref[...], w_ref[...],
                preferred_element_type=jnp.float32) + b_ref[...]
    # v4 = where(y > 0, y, y * negative_slope)
    o_ref[...] = jnp.where(y > 0, y, y * jnp.float32(NEGATIVE_SLOPE))


def _round_up(a, m):
    return ((a + m - 1) // m) * m


def _pick_block_rows(rows):
    """Packed rows per grid step.  Keeps the sublane dim a multiple of 8,
    amortizes the ~0.35 us per-step overhead, and keeps >=2 grid steps when
    there is enough work so v7x's second TensorCore participates."""
    if rows <= 16:
        return _round_up(rows, 8)                       # tiny batch: 1 step
    if rows <= 2 * TARGET_BLOCK_ROWS:
        return _round_up(pl.cdiv(rows, 2), 8)           # exactly 2 steps
    return TARGET_BLOCK_ROWS                            # many fat steps


def model_forward(x, weight, bias):
    """x: (B, IN); weight: (OUT, IN) (PyTorch layout); bias: (OUT,)."""
    B = x.shape[0]
    x = x.astype(jnp.float32)

    rows = pl.cdiv(B, PACK)                      # packed rows needed
    block_rows = _pick_block_rows(rows)
    grid_steps = pl.cdiv(rows, block_rows)
    padded_rows = grid_steps * block_rows
    padded_B = padded_rows * PACK

    # Pad the batch (zeros) so every grid step is a full tile; sliced off below.
    if padded_B != B:
        x = jnp.pad(x, ((0, padded_B - B), (0, 0)))
    # Free row-major metadata reshape: packed[r, 4*i + k] = x[PACK*r + i, k]
    x_packed = x.reshape(padded_rows, IN_PACKED)

    # Host-side (trace-time) weight repack: block-diagonal so one lane-dense
    # matmul computes 32 independent rows of the original 4->8 linear layer.
    w_t = weight.T.astype(jnp.float32)                           # (IN, OUT)
    w_bd = jnp.kron(jnp.eye(PACK, dtype=jnp.float32), w_t)       # (128, 256)
    bias_tiled = jnp.tile(bias.astype(jnp.float32), PACK).reshape(1, OUT_PACKED)

    out_packed = pl.pallas_call(
        linear_leaky_kernel,
        out_shape=jax.ShapeDtypeStruct((padded_rows, OUT_PACKED), jnp.float32),
        grid=(grid_steps,),
        in_specs=[
            pl.BlockSpec((block_rows, IN_PACKED), lambda i: (i, 0),
                         memory_space=pltpu.MemorySpace.VMEM),
            # weight / bias stay resident in VMEM across the whole batch grid
            pl.BlockSpec((IN_PACKED, OUT_PACKED), lambda i: (0, 0),
                         memory_space=pltpu.MemorySpace.VMEM),
            pl.BlockSpec((1, OUT_PACKED), lambda i: (0, 0),
                         memory_space=pltpu.MemorySpace.VMEM),
        ],
        out_specs=pl.BlockSpec((block_rows, OUT_PACKED), lambda i: (i, 0),
                               memory_space=pltpu.MemorySpace.VMEM),
        compiler_params=pltpu.CompilerParams(
            dimension_semantics=("parallel",),      # 2nd TC on v7x; no-op v5e/v6e
            vmem_limit_bytes=32 * 1024 * 1024),
    )(x_packed, w_bd, bias_tiled)

    # Free reshape back to (padded_B, 8), then drop the padding rows.
    return out_packed.reshape(padded_B, OUT_FEATURES)[:B]


def reference_forward(x, weight, bias):
    y = x @ weight.T + bias
    return jnp.where(y > 0, y, y * NEGATIVE_SLOPE)


if __name__ == "__main__":
    key = jax.random.PRNGKey(0)
    kx, kw, kb = jax.random.split(key, 3)

    batch = 16
    x = jax.random.normal(kx, (batch, IN_FEATURES), dtype=jnp.float32)

    # Deterministic parameter init (mimics nn.Linear uniform bound 1/sqrt(fan_in))
    bound = 1.0 / jnp.sqrt(jnp.float32(IN_FEATURES))
    weight = jax.random.uniform(
        kw, (OUT_FEATURES, IN_FEATURES), minval=-bound, maxval=bound,
        dtype=jnp.float32)
    bias = jax.random.uniform(
        kb, (OUT_FEATURES,), minval=-bound, maxval=bound, dtype=jnp.float32)

    out = model_forward(x, weight, bias)
    out = jax.block_until_ready(out)

    ref = reference_forward(x, weight, bias)
    assert out.shape == (batch, OUT_FEATURES)
    assert jnp.allclose(out, ref, atol=1e-5, rtol=1e-5), "mismatch vs reference"

    # Also check an awkward (non-divisible, multi-tile-worthy) batch size.
    batch2 = 5000
    x2 = jax.random.normal(kx, (batch2, IN_FEATURES), dtype=jnp.float32)
    out2 = jax.block_until_ready(model_forward(x2, weight, bias))
    ref2 = reference_forward(x2, weight, bias)
    assert out2.shape == (batch2, OUT_FEATURES)
    assert jnp.allclose(out2, ref2, atol=1e-5, rtol=1e-5), "mismatch vs reference (ragged)"

    print("KERNEL_OK")
</pallas_src>

<mosaic_0001>
module attributes {stable_mosaic.version = 11 : i64} {
  func.func @linear_leaky_kernel(%arg0: i32, %arg1: memref<8x128xf32, #tpu.memory_space<vmem>>, %arg2: memref<128x256xf32, #tpu.memory_space<vmem>>, %arg3: memref<1x256xf32, #tpu.memory_space<vmem>>, %arg4: memref<8x256xf32, #tpu.memory_space<vmem>>) attributes {dimension_semantics = [#tpu.dimension_semantics<parallel>], iteration_bounds = array<i64: 1>, scalar_prefetch = 0 : i64, scratch_operands = 0 : i64, tpu.core_type = #tpu.core_type<tc>, window_params = [{transform_indices = @transform_0, window_bounds = array<i64: 8, 128>}, {pipeline_mode = #tpu.pipeline_mode<synchronous>, transform_indices = @transform_1, window_bounds = array<i64: 128, 256>}, {pipeline_mode = #tpu.pipeline_mode<synchronous>, transform_indices = @transform_2, window_bounds = array<i64: 1, 256>}, {transform_indices = @transform_3, window_bounds = array<i64: 8, 256>}]} {
    %c0 = arith.constant 0 : index
    %c0_0 = arith.constant 0 : index
    %0 = vector.load %arg1[%c0, %c0_0] : memref<8x128xf32, #tpu.memory_space<vmem>>, vector<8x128xf32>
    %c0_1 = arith.constant 0 : index
    %c0_2 = arith.constant 0 : index
    %1 = vector.load %arg2[%c0_1, %c0_2] : memref<128x256xf32, #tpu.memory_space<vmem>>, vector<128x256xf32>
    %cst = arith.constant dense<0.000000e+00> : vector<8x256xf32>
    %2 = tpu.matmul %0, %1, %cst {dimension_numbers = #tpu.dot_dimension_numbers<[1], [0], [0], [1], [0, 0, 1, 1], [], []>} : vector<8x128xf32>, vector<128x256xf32>, vector<8x256xf32> -> vector<8x256xf32>
    %c0_3 = arith.constant 0 : index
    %c0_4 = arith.constant 0 : index
    %3 = vector.load %arg3[%c0_3, %c0_4] : memref<1x256xf32, #tpu.memory_space<vmem>>, vector<1x256xf32>
    %4 = vector.broadcast %3 : vector<1x256xf32> to vector<8x256xf32>
    %5 = arith.addf %2, %4 : vector<8x256xf32>
    %cst_5 = arith.constant 0.000000e+00 : f32
    %6 = vector.broadcast %cst_5 : f32 to vector<8x256xf32>
    %7 = arith.cmpf ogt, %5, %6 : vector<8x256xf32>
    %cst_6 = arith.constant 3.000000e+00 : f32
    %8 = vector.broadcast %cst_6 : f32 to vector<8x256xf32>
    %9 = arith.mulf %5, %8 : vector<8x256xf32>
    %10 = arith.select %7, %5, %9 : vector<8x256xi1>, vector<8x256xf32>
    %c0_7 = arith.constant 0 : index
    %c0_8 = arith.constant 0 : index
    %11 = vector.load %arg4[%c0_7, %c0_8] : memref<8x256xf32, #tpu.memory_space<vmem>>, vector<8x256xf32>
    tpu.vector_store %arg4[%c0_7, %c0_8], %10 {strides = array<i32>} : memref<8x256xf32, #tpu.memory_space<vmem>>, vector<8x256xf32>,
    return
  }
  func.func @transform_0(%arg0: i32) -> (i32, i32) {
    %c0_i32 = arith.constant 0 : i32
    %c0_i32_0 = arith.constant 0 : i32
    return %arg0, %c0_i32 : i32, i32
  }
  func.func @transform_1(%arg0: i32) -> (i32, i32) {
    %c0_i32 = arith.constant 0 : i32
    %c0_i32_0 = arith.constant 0 : i32
    %c0_i32_1 = arith.constant 0 : i32
    return %c0_i32, %c0_i32_0 : i32, i32
  }
  func.func @transform_2(%arg0: i32) -> (i32, i32) {
    %c0_i32 = arith.constant 0 : i32
    %c0_i32_0 = arith.constant 0 : i32
    %c0_i32_1 = arith.constant 0 : i32
    return %c0_i32, %c0_i32_0 : i32, i32
  }
  func.func @transform_3(%arg0: i32) -> (i32, i32) {
    %c0_i32 = arith.constant 0 : i32
    %c0_i32_0 = arith.constant 0 : i32
    return %arg0, %c0_i32 : i32, i32
  }
}

</mosaic_0001>

<llo_original>
// kernel: tpu_custom_call.1
$region0: #{tpu_custom_call.1}
  #allocation0 [shape = 'u32[]', space=smem, size = 0x4, offset = 0x4, fixed_abs, tag = 'smem constant byte address 0x4 - core index']
  #allocation1 [shape = 'u32[72,128]{1,0:T(1,128)}', space=vmem, size = 0x9000, scoped, tag = 'internal scratch']
  %s0 = inlined_call_operand.hbm [shape: f32[8,128], index: 0, kind: input, shape index: {}]
  %s1 = inlined_call_operand.hbm [shape: f32[128,256], index: 1, kind: input, shape index: {}]
  %s2 = inlined_call_operand.hbm [shape: f32[1,256], index: 2, kind: input, shape index: {}]
  %s3 = inlined_call_operand.hbm [shape: f32[8,256], index: 3, kind: output, shape index: {}]
  %s4 = sld [smem:[#allocation0]]
  $region34: #{tpu_custom_call.1} parent=0
    _
  %s6 = ssub.s32 1, %s4
  %s7 = scalar_select 0, %s6, %s4
  $region1: #{tpu_custom_call.1} parent=0
    #allocation2 [shape = 'u8[4096]{0}', space=vmem, size = 0x1000, scoped, tag = 'input window, operand 0, single buffered']
    #allocation3 [shape = 's32[1]{0}', space=sflag, size = 0x4, scoped, tag = 'scoped memory for tpu_custom_call.1']
    #allocation4 [shape = 's32[1]{0}', space=sflag, size = 0x4, scoped, tag = 'scoped memory for tpu_custom_call.1']
    #allocation5 [shape = 'u8[131072]{0}', space=vmem, size = 0x20000, scoped, tag = 'input window, operand 1, single buffered']
    #allocation6 [shape = 's32[1]{0}', space=sflag, size = 0x4, scoped, tag = 'scoped memory for tpu_custom_call.1']
    #allocation7 [shape = 'u8[1024]{0}', space=vmem, size = 0x400, scoped, tag = 'input window, operand 2, single buffered']
    #allocation8 [shape = 'u8[8192]{0}', space=vmem, size = 0x2000, scoped, tag = 'output window, operand 0, single buffered']
    %8 = vsyncpa [#allocation3], 0
    %9 = vsyncpa [#allocation6], 0
    %10 = vsyncpa [#allocation4], 0
    // Predicated region
    $region2: #{tpu_custom_call.1} parent=1 // pred_check
      _
    $region3: #{tpu_custom_call.1} parent=1 // pred_check_branch
      %12 = sbr.rel (0) target = $region5
    $region4: #{tpu_custom_call.1} parent=1 // pred_region
      %14 = vsyncadd [#allocation3], 0
      %s16 = sshll.u32 %s0, 4
      %s17 = int_to_ptr.hbm [resolvable:$true] %s16
      %s18 = sshll.u32 [#allocation2], 4
      %s19 = int_to_ptr.vmem [resolvable:$true] %s18
      %21 = dma.hbm_to_vmem [thread:$0]  %s17, 128, %s19, [#allocation3]
    $region5: #{tpu_custom_call.1} parent=1 // pred_fallthru
      _
    // Predicated region
    $region6: #{tpu_custom_call.1} parent=1 // pred_check
      _
    $region7: #{tpu_custom_call.1} parent=1 // pred_check_branch
      %23 = sbr.rel (0) target = $region9
    $region8: #{tpu_custom_call.1} parent=1 // pred_region
      %25 = vsyncadd [#allocation6], 0
      %s26 = sshll.u32 %s1, 4
      %s27 = int_to_ptr.hbm [resolvable:$true] %s26
      %s28 = sshll.u32 [#allocation5], 4
      %s29 = int_to_ptr.vmem [resolvable:$true] %s28
      %34 = dma.hbm_to_vmem [thread:$0]  %s27, 4096, %s29, [#allocation6], 256, 256, 16
    $region9: #{tpu_custom_call.1} parent=1 // pred_fallthru
      _
    // Predicated region
    $region10: #{tpu_custom_call.1} parent=1 // pred_check
      _
    $region11: #{tpu_custom_call.1} parent=1 // pred_check_branch
      %36 = sbr.rel (0) target = $region13
    $region12: #{tpu_custom_call.1} parent=1 // pred_region
      %38 = vsyncadd [#allocation6], 0
      %s40 = sshll.u32 %s2, 4
      %s41 = int_to_ptr.hbm [resolvable:$true] %s40
      %s42 = sshll.u32 [#allocation7], 4
      %s43 = int_to_ptr.vmem [resolvable:$true] %s42
      %45 = dma.hbm_to_vmem [thread:$0]  %s41, 32, %s43, [#allocation6]
    $region13: #{tpu_custom_call.1} parent=1 // pred_fallthru
      _
    // Predicated region
    $region14: #{tpu_custom_call.1} parent=1 // pred_check
      _
    $region15: #{tpu_custom_call.1} parent=1 // pred_check_branch
      %47 = sbr.rel (0) target = $region17
    $region16: #{tpu_custom_call.1} parent=1 // pred_region
      %49 = dma.done [#allocation3], 128
    $region17: #{tpu_custom_call.1} parent=1 // pred_fallthru
      _
    // Predicated region
    $region18: #{tpu_custom_call.1} parent=1 // pred_check
      _
    $region19: #{tpu_custom_call.1} parent=1 // pred_check_branch
      %51 = sbr.rel (0) target = $region21
    $region20: #{tpu_custom_call.1} parent=1 // pred_region
      %53 = dma.done [#allocation6], 4096
    $region21: #{tpu_custom_call.1} parent=1 // pred_fallthru
      _
    // Predicated region
    $region22: #{tpu_custom_call.1} parent=1 // pred_check
      _
    $region23: #{tpu_custom_call.1} parent=1 // pred_check_branch
      %55 = sbr.rel (0) target = $region25
    $region24: #{tpu_custom_call.1} parent=1 // pred_region
      %57 = dma.done [#allocation6], 32
    $region25: #{tpu_custom_call.1} parent=1 // pred_fallthru
      _
    %v58 = vld [vmem:[#allocation2] sm:$0xff]
    %v59 = vld [vmem:[#allocation5] sm:$0xff]
    %v60 = vld [vmem:[#allocation5 + $0x8] sm:$0xff]
    %v61 = vld [vmem:[#allocation5 + $0x10] sm:$0xff]
    %v62 = vld [vmem:[#allocation5 + $0x18] sm:$0xff]
    %v63 = vld [vmem:[#allocation5 + $0x20] sm:$0xff]
    %v64 = vld [vmem:[#allocation5 + $0x28] sm:$0xff]
    %v65 = vld [vmem:[#allocation5 + $0x30] sm:$0xff]
    %v66 = vld [vmem:[#allocation5 + $0x38] sm:$0xff]
    %v67 = vld [vmem:[#allocation5 + $0x40] sm:$0xff]
    %v68 = vld [vmem:[#allocation5 + $0x48] sm:$0xff]
    %v69 = vld [vmem:[#allocation5 + $0x50] sm:$0xff]
    %v70 = vld [vmem:[#allocation5 + $0x58] sm:$0xff]
    %v71 = vld [vmem:[#allocation5 + $0x60] sm:$0xff]
    %v72 = vld [vmem:[#allocation5 + $0x68] sm:$0xff]
    %v73 = vld [vmem:[#allocation5 + $0x70] sm:$0xff]
    %v74 = vld [vmem:[#allocation5 + $0x78] sm:$0xff]
    %v75 = vld [vmem:[#allocation5 + $0x80] sm:$0xff]
    %v76 = vld [vmem:[#allocation5 + $0x88] sm:$0xff]
    %v77 = vld [vmem:[#allocation5 + $0x90] sm:$0xff]
    %v78 = vld [vmem:[#allocation5 + $0x98] sm:$0xff]
    %v79 = vld [vmem:[#allocation5 + $0xa0] sm:$0xff]
    %v80 = vld [vmem:[#allocation5 + $0xa8] sm:$0xff]
    %v81 = vld [vmem:[#allocation5 + $0xb0] sm:$0xff]
    %v82 = vld [vmem:[#allocation5 + $0xb8] sm:$0xff]
    %v83 = vld [vmem:[#allocation5 + $0xc0] sm:$0xff]
    %v84 = vld [vmem:[#allocation5 + $0xc8] sm:$0xff]
    %v85 = vld [vmem:[#allocation5 + $0xd0] sm:$0xff]
    %v86 = vld [vmem:[#allocation5 + $0xd8] sm:$0xff]
    %v87 = vld [vmem:[#allocation5 + $0xe0] sm:$0xff]
    %v88 = vld [vmem:[#allocation5 + $0xe8] sm:$0xff]
    %v89 = vld [vmem:[#allocation5 + $0xf0] sm:$0xff]
    %v90 = vld [vmem:[#allocation5 + $0xf8] sm:$0xff]
    %v91 = vld [vmem:[#allocation7] sm:$0x3]
    %v93 = vperm.slane %v91, 0
    %v94 = vperm.slane %v91, 1
    %97 = vmatpush.msra.mxu0 %v89
    %98 = vmatpush.msra.mxu0 %v87
    %99 = vmatpush.msra.mxu0 %v85
    %100 = vmatpush.msra.mxu0 %v83
    %101 = vmatpush.msra.mxu0 %v81
    %102 = vmatpush.msra.mxu0 %v79
    %103 = vmatpush.msra.mxu0 %v77
    %104 = vmatpush.msra.mxu0 %v75
    %105 = vmatpush.msra.mxu0 %v73
    %106 = vmatpush.msra.mxu0 %v71
    %107 = vmatpush.msra.mxu0 %v69
    %108 = vmatpush.msra.mxu0 %v67
    %109 = vmatpush.msra.mxu0 %v65
    %110 = vmatpush.msra.mxu0 %v63
    %111 = vmatpush.msra.mxu0 %v61
    %112 = vmatpush.msra.mxu0 %v59
    %113 = vmatmul.f32.gmra.mxu0 %v58
    %v114 = vpop.f32.mrf.mxu0
    %v115 = vadd.f32 %v93, %v114
    %116 = vdwg.mxu0
    %117 = vmatpush.msra.mxu0 %v90
    %118 = vmatpush.msra.mxu0 %v88
    %119 = vmatpush.msra.mxu0 %v86
    %120 = vmatpush.msra.mxu0 %v84
    %121 = vmatpush.msra.mxu0 %v82
    %122 = vmatpush.msra.mxu0 %v80
    %123 = vmatpush.msra.mxu0 %v78
    %124 = vmatpush.msra.mxu0 %v76
    %125 = vmatpush.msra.mxu0 %v74
    %126 = vmatpush.msra.mxu0 %v72
    %127 = vmatpush.msra.mxu0 %v70
    %128 = vmatpush.msra.mxu0 %v68
    %129 = vmatpush.msra.mxu0 %v66
    %130 = vmatpush.msra.mxu0 %v64
    %131 = vmatpush.msra.mxu0 %v62
    %132 = vmatpush.msra.mxu0 %v60
    %133 = vmatmul.f32.gmra.mxu0 %v58
    %v134 = vpop.f32.mrf.mxu0
    %v135 = vadd.f32 %v94, %v134
    %136 = vdwg.mxu0
    %vm137 = vcmp.gt.f32.partialorder %v115, 0.0
    %vm138 = vcmp.gt.f32.partialorder %v135, 0.0
    %v139 = vmul.f32 %v115, 3.0
    %v140 = vmul.f32 %v135, 3.0
    %v141 = vsel %vm137, %v115, %v139
    %v142 = vsel %vm138, %v135, %v140
    %143 = vst [vmem:[#allocation8] sm:$0xff] %v141
    %144 = vst [vmem:[#allocation8 + $0x8] sm:$0xff] %v142
    // Predicated region
    $region26: #{tpu_custom_call.1} parent=1 // pred_check
      _
    $region27: #{tpu_custom_call.1} parent=1 // pred_check_branch
      %146 = sbr.rel (0) target = $region29
    $region28: #{tpu_custom_call.1} parent=1 // pred_region
      %148 = vsyncadd [#allocation4], 0
      %s150 = sshll.u32 [#allocation8], 4
      %s151 = int_to_ptr.vmem [resolvable:$true] %s150
      %s152 = sshll.u32 %s3, 4
      %s153 = int_to_ptr.hbm [resolvable:$true] %s152
      %155 = dma.vmem_to_hbm [thread:$0]  %s151, 256, %s153, [#allocation4]
    $region29: #{tpu_custom_call.1} parent=1 // pred_fallthru
      _
    // Predicated region
    $region30: #{tpu_custom_call.1} parent=1 // pred_check
      _
    $region31: #{tpu_custom_call.1} parent=1 // pred_check_branch
      %157 = sbr.rel (0) target = $region33
    $region32: #{tpu_custom_call.1} parent=1 // pred_region
      %159 = dma.done [#allocation4], 256
    $region33: #{tpu_custom_call.1} parent=1 // pred_fallthru
      _
    %160 = vsyncpa [#allocation3], 1
    %161 = vsyncpa [#allocation6], 1
    %162 = vsyncpa [#allocation4], 1

</llo_original>
